<compile_context>
chip_gen: v7x
topology: tpu7x:2x2x1
jax: 0.10.0
libtpu: 0.0.40
codegen_flags: <defaults>
</compile_context>

<pallas_src>
import functools

import numpy as np

import jax
import jax.numpy as jnp
from jax.experimental import pallas as pl
from jax.experimental.pallas import tpu as pltpu


# ----------------------------------------------------------------------------
# constants / per-generation knobs
# ----------------------------------------------------------------------------
SEQ_TILE = 512                       # q / kv tile for attention + seq padding
DEF_TM = 2048                        # max rows per matmul M block (collapse M)
DEF_TK = 1280                        # max K per matmul K block
TN_CANDIDATES = (768, 640, 512, 384, 256, 128)
HEAD_GROUP_LANES = 1024              # max lane width (G * head_dim) per attn step
NEG_INF = -1e30


def _device_kind():
    try:
        return jax.devices()[0].device_kind.lower()
    except Exception:
        return ""


_KIND = _device_kind()
# bf16 exp only where the EUP supports it (v6e / v7x); f32 on v5e / unknown.
USE_BF16_EXP = any(t in _KIND for t in ("v6", "v7", "7x"))


def _vmem_limit_bytes():
    try:
        cap = int(pltpu.get_tpu_info().vmem_capacity_bytes)
    except Exception:
        cap = 64 * 1024 * 1024
    # leave 16 MiB headroom, clamp to a sane range for v5e/v6e (128 MiB) / v7x (64 MiB)
    return int(min(max(cap - 16 * 1024 * 1024, 32 * 1024 * 1024),
                   112 * 1024 * 1024))


VMEM_LIMIT = _vmem_limit_bytes()


def _cp(*sem):
    return pltpu.CompilerParams(dimension_semantics=sem,
                                vmem_limit_bytes=VMEM_LIMIT)


def _round_up(x, m):
    return (x + m - 1) // m * m


def _split_axis(size, cap, align):
    """Split an axis into n equal blocks of size <= cap (aligned). -> (tile, padded)."""
    p0 = _round_up(max(size, 1), align)
    n = max(1, -(-p0 // cap))
    t = _round_up(-(-p0 // n), align)
    return t, t * n


def _choose_tn(n):
    np0 = _round_up(n, 128)
    for c in TN_CANDIDATES:
        if np0 % c == 0:
            return c, np0
    return 128, np0


def _pad2(x, rows, cols):
    r, c = x.shape
    if (r, c) == (rows, cols):
        return x
    return jnp.pad(x, ((0, rows - r), (0, cols - c)))


def _pad1(x, n):
    if x.shape[0] == n:
        return x
    return jnp.pad(x, ((0, n - x.shape[0]),))


def _gelu(x):
    # tanh-approx GELU (<~1e-3 from torch's exact erf GELU); one EUP op.
    c = 0.7978845608028654  # sqrt(2/pi)
    return 0.5 * x * (1.0 + jnp.tanh(c * (x + 0.044715 * x * x * x)))


# ----------------------------------------------------------------------------
# tiled matmul (+bias, +optional GELU, +optional fused residual add)
# ----------------------------------------------------------------------------
def _matmul_kernel(x_ref, w_ref, b_ref, *rest, act, has_residual):
    if has_residual:
        r_ref, o_ref, acc_ref = rest
    else:
        o_ref, acc_ref = rest
        r_ref = None
    k = pl.program_id(2)

    @pl.when(k == 0)
    def _():
        acc_ref[...] = jnp.zeros_like(acc_ref)

    acc_ref[...] += jnp.dot(x_ref[...], w_ref[...],
                            preferred_element_type=jnp.float32)

    @pl.when(k == pl.num_programs(2) - 1)
    def _():
        y = acc_ref[...] + b_ref[...].astype(jnp.float32)
        if act == "gelu":
            y = _gelu(y)
        if has_residual:
            y = y + r_ref[...].astype(jnp.float32)
        o_ref[...] = y.astype(o_ref.dtype)


def linear(x, w, b, *, act="none", residual=None, out_dtype=jnp.bfloat16):
    """y = act(x @ w + b) (+ residual). bf16 operands, f32 accumulation.

    M axis is collapsed (one or few big row blocks) so each weight matrix is
    streamed from HBM exactly once."""
    M, K = x.shape
    N = w.shape[1]
    tm, Mp = _split_axis(M, DEF_TM, 8)
    tk, Kp = _split_axis(K, DEF_TK, 128)
    tn, Np = _choose_tn(N)

    ins = [_pad2(x, Mp, Kp).astype(jnp.bfloat16),
           _pad2(w, Kp, Np).astype(jnp.bfloat16),
           _pad1(b, Np).astype(jnp.float32).reshape(1, Np)]
    in_specs = [pl.BlockSpec((tm, tk), lambda i, j, k: (i, k)),
                pl.BlockSpec((tk, tn), lambda i, j, k: (k, j)),
                pl.BlockSpec((1, tn), lambda i, j, k: (0, j))]
    if residual is not None:
        ins.append(_pad2(residual, Mp, Np))
        in_specs.append(pl.BlockSpec((tm, tn), lambda i, j, k: (i, j)))

    out = pl.pallas_call(
        functools.partial(_matmul_kernel, act=act,
                          has_residual=residual is not None),
        out_shape=jax.ShapeDtypeStruct((Mp, Np), out_dtype),
        grid=(Mp // tm, Np // tn, Kp // tk),
        in_specs=in_specs,
        out_specs=pl.BlockSpec((tm, tn), lambda i, j, k: (i, j)),
        scratch_shapes=[pltpu.VMEM((tm, tn), jnp.float32)],
        compiler_params=_cp("parallel", "parallel", "arbitrary"),
    )(*ins)
    return out[:M, :N]


# ----------------------------------------------------------------------------
# layernorm (optionally preceded by a 2:1 avg-pool) fused into the following
# matmul; LN result cached in a VMEM scratch and reused for every N tile.
# ----------------------------------------------------------------------------
def _ln_matmul_kernel(x_ref, g_ref, bb_ref, w_ref, b_ref, o_ref, xn_ref, *,
                      act, eps, k_valid, pool2):
    @pl.when(pl.program_id(1) == 0)
    def _():
        x = x_ref[...].astype(jnp.float32)
        if pool2:
            half = x.shape[1] // 2
            x = 0.5 * (x[:, :half] + x[:, half:])
        if k_valid is not None:
            valid = jax.lax.broadcasted_iota(jnp.int32, x.shape, 1) < k_valid
            x = jnp.where(valid, x, 0.0)
            denom = float(k_valid)
        else:
            valid = None
            denom = float(x.shape[1])
        mu = jnp.sum(x, axis=-1, keepdims=True) * (1.0 / denom)
        xc = x - mu
        if valid is not None:
            xc = jnp.where(valid, xc, 0.0)
        var = jnp.sum(xc * xc, axis=-1, keepdims=True) * (1.0 / denom)
        xn = xc * jax.lax.rsqrt(var + eps)
        xn = xn * g_ref[...].astype(jnp.float32) + bb_ref[...].astype(jnp.float32)
        if valid is not None:
            xn = jnp.where(valid, xn, 0.0)
        xn_ref[...] = xn.astype(xn_ref.dtype)

    y = jnp.dot(xn_ref[...], w_ref[...], preferred_element_type=jnp.float32)
    y = y + b_ref[...].astype(jnp.float32)
    if act == "gelu":
        y = _gelu(y)
    o_ref[...] = y.astype(o_ref.dtype)


def ln_linear(x, ln_g, ln_b, w, b, *, act="none", eps=1e-5,
              out_dtype=jnp.bfloat16, keep_padded=False, pool2=False):
    """y = act(layernorm([avgpool2](x)) @ w + b); feature dim is one K block.

    pool2=True expects x packed as (M, 2*Kp): row pairs side by side on the lane
    axis; the 2:1 average happens inside the kernel prologue."""
    M = x.shape[0]
    K, N = w.shape
    Kp = _round_up(K, 128)
    tm, Mp = _split_axis(M, DEF_TM, 8)
    tn, Np = _choose_tn(N)
    xw = 2 * Kp if pool2 else Kp
    if pool2:
        assert x.shape[1] == xw
        xin = _pad2(x, Mp, xw).astype(jnp.bfloat16)
    else:
        xin = _pad2(x, Mp, Kp).astype(jnp.bfloat16)

    out = pl.pallas_call(
        functools.partial(_ln_matmul_kernel, act=act, eps=eps,
                          k_valid=None if Kp == K else K, pool2=pool2),
        out_shape=jax.ShapeDtypeStruct((Mp, Np), out_dtype),
        grid=(Mp // tm, Np // tn),
        in_specs=[pl.BlockSpec((tm, xw), lambda i, j: (i, 0)),
                  pl.BlockSpec((1, Kp), lambda i, j: (0, 0)),
                  pl.BlockSpec((1, Kp), lambda i, j: (0, 0)),
                  pl.BlockSpec((Kp, tn), lambda i, j: (0, j)),
                  pl.BlockSpec((1, tn), lambda i, j: (0, j))],
        out_specs=pl.BlockSpec((tm, tn), lambda i, j: (i, j)),
        scratch_shapes=[pltpu.VMEM((tm, Kp), jnp.bfloat16)],
        compiler_params=_cp("parallel", "arbitrary"),
    )(xin,
      _pad1(ln_g, Kp).astype(jnp.float32).reshape(1, Kp),
      _pad1(ln_b, Kp).astype(jnp.float32).reshape(1, Kp),
      _pad2(w, Kp, Np).astype(jnp.bfloat16),
      _pad1(b, Np).astype(jnp.float32).reshape(1, Np))
    return out if keep_padded else out[:M, :N]


# ----------------------------------------------------------------------------
# block-sparse flash attention: per-row window bounds (wstart/wend) as tiny
# int32 VMEM inputs, per-q-tile KV-tile start/count scalar-prefetched so the
# KV grid axis only covers tiles intersecting the q tile's windows.
# ----------------------------------------------------------------------------
def _flash_attn_kernel(kvs_ref, kvc_ref,              # scalar prefetch (SMEM)
                       q_ref, k_ref, v_ref, ws_ref, we_ref,
                       o_ref, m_ref, l_ref, acc_ref, *,
                       G, Dh, use_bf16_exp):
    qi = pl.program_id(1)
    ki = pl.program_id(2)
    tq = q_ref.shape[0]
    tkv = k_ref.shape[0]

    @pl.when(ki == 0)
    def _():
        m_ref[...] = jnp.full_like(m_ref, NEG_INF)
        l_ref[...] = jnp.zeros_like(l_ref)
        acc_ref[...] = jnp.zeros_like(acc_ref)

    @pl.when(ki < kvc_ref[qi])                        # skip non-intersecting tiles
    def _():
        kv0 = (kvs_ref[qi] + ki) * tkv                # global kv offset of this tile
        kpos = kv0 + jax.lax.broadcasted_iota(jnp.int32, (tq, tkv), 1)
        allowed = (kpos >= ws_ref[...]) & (kpos < we_ref[...])

        qg = q_ref[...]
        kg = k_ref[...]
        vg = v_ref[...]
        m_prev_all = m_ref[...]
        l_prev_all = l_ref[...]
        acc_prev = acc_ref[...]

        new_m, new_l, new_acc = [], [], []
        for g in range(G):                            # static unroll over heads
            lo, hi = g * Dh, (g + 1) * Dh
            q = qg[:, lo:hi]
            k = kg[:, lo:hi]
            v = vg[:, lo:hi]
            # q @ k^T via dot_general contracting the head dim (no transpose);
            # softmax scale already folded into the q-projection weights.
            s = jax.lax.dot_general(q, k, (((1,), (1,)), ((), ())),
                                    preferred_element_type=jnp.float32)
            s = jnp.where(allowed, s, NEG_INF)

            m_prev = m_prev_all[:, g:g + 1]
            m_cur = jnp.maximum(m_prev, jnp.max(s, axis=-1, keepdims=True))
            alpha = jnp.exp(m_prev - m_cur)
            d = s - m_cur
            if use_bf16_exp:
                p = jnp.exp(d.astype(jnp.bfloat16))   # EUP bf16 on v6e/v7x
            else:
                p = jnp.exp(d)
            # zero disallowed entries (also fixes exp(0)=1 on fully-masked rows)
            p = jnp.where(allowed, p, jnp.zeros_like(p))

            l_new = alpha * l_prev_all[:, g:g + 1] + jnp.sum(
                p, axis=-1, keepdims=True, dtype=jnp.float32)
            pv = jax.lax.dot_general(p.astype(v.dtype), v,
                                     (((1,), (0,)), ((), ())),
                                     preferred_element_type=jnp.float32)
            new_acc.append(alpha * acc_prev[:, lo:hi] + pv)
            new_m.append(m_cur)
            new_l.append(l_new)

        # lane-dense full-width stores (single unmasked vst each)
        if G < m_ref.shape[1]:
            new_m.append(m_prev_all[:, G:])
            new_l.append(l_prev_all[:, G:])
        m_ref[...] = jnp.concatenate(new_m, axis=1)
        l_ref[...] = jnp.concatenate(new_l, axis=1)
        acc_ref[...] = jnp.concatenate(new_acc, axis=1)

    @pl.when(ki == pl.num_programs(2) - 1)
    def _():
        l_all = l_ref[...]
        acc = acc_ref[...]
        outs = []
        for g in range(G):
            inv = pl.reciprocal(l_all[:, g:g + 1], approx=True)
            outs.append((acc[:, g * Dh:(g + 1) * Dh] * inv).astype(o_ref.dtype))
        o_ref[...] = jnp.concatenate(outs, axis=1)


def flash_attention(qkv, D, num_heads, meta):
    """qkv: (Sp, >=3D) padded fused QKV projection; returns (Sp, D) bf16."""
    Sp = qkv.shape[0]
    H = num_heads
    Dh = D // H
    # largest divisor of H such that the head-group lane width stays <= cap
    G = 1
    for g in range(H, 0, -1):
        if H % g == 0 and g * Dh <= HEAD_GROUP_LANES:
            G = g
            break
    w = G * Dh
    HG = H // G

    tq = meta["tq"]
    tkv = tq
    nq = Sp // tq
    nkv = meta["nkv_max"]

    qkv3 = qkv[:, :3 * D]                             # 3*D is a multiple of w

    def q_map(hg, qi, ki, kvs, kvc):
        return (qi, hg)

    def k_map(hg, qi, ki, kvs, kvc):
        return (kvs[qi] + jnp.minimum(ki, kvc[qi] - 1), HG + hg)

    def v_map(hg, qi, ki, kvs, kvc):
        return (kvs[qi] + jnp.minimum(ki, kvc[qi] - 1), 2 * HG + hg)

    def w_map(hg, qi, ki, kvs, kvc):
        return (qi, 0)

    def o_map(hg, qi, ki, kvs, kvc):
        return (qi, hg)

    out = pl.pallas_call(
        functools.partial(_flash_attn_kernel, G=G, Dh=Dh,
                          use_bf16_exp=USE_BF16_EXP),
        out_shape=jax.ShapeDtypeStruct((Sp, D), jnp.bfloat16),
        grid_spec=pltpu.PrefetchScalarGridSpec(
            num_scalar_prefetch=2,
            grid=(HG, nq, nkv),
            in_specs=[pl.BlockSpec((tq, w), q_map),
                      pl.BlockSpec((tkv, w), k_map),
                      pl.BlockSpec((tkv, w), v_map),
                      pl.BlockSpec((tq, 1), w_map),
                      pl.BlockSpec((tq, 1), w_map)],
            out_specs=pl.BlockSpec((tq, w), o_map),
            scratch_shapes=[pltpu.VMEM((tq, 128), jnp.float32),   # running max
                            pltpu.VMEM((tq, 128), jnp.float32),   # running sum
                            pltpu.VMEM((tq, w), jnp.float32)]),   # out accum
        compiler_params=_cp("parallel", "parallel", "arbitrary"),
    )(meta["kvs"], meta["kvc"], qkv3, qkv3, qkv3, meta["ws"], meta["we"])
    return out


def _window_meta(attention_mask, S, Sp, tq):
    """Derive per-row window bounds + per-q-tile KV-tile ranges (host side).

    The dense additive mask is assumed block-diagonal / banded (as produced by
    Qwen2_5OmniAudio.audio_process): per row it is reduced to one contiguous
    [first_allowed, last_allowed+1) range.
    """
    # TODO(synk): arbitrary (non-banded) dense masks are approximated by their
    # per-row contiguous hull; the model never produces such masks.
    if attention_mask is None:
        ws = np.zeros((Sp,), np.int32)
        we = np.full((Sp,), S, np.int32)
    else:
        m = np.asarray(jax.device_get(attention_mask), dtype=np.float32)
        m = m.reshape(m.shape[-2], m.shape[-1])[:S, :S]
        allowed = m > -1e4
        any_row = allowed.any(axis=1)
        first = np.where(any_row, allowed.argmax(axis=1), 0).astype(np.int64)
        last = np.where(any_row, S - allowed[:, ::-1].argmax(axis=1), 1).astype(np.int64)
        ws = np.concatenate([first, np.full((Sp - S,), first[-1])]).astype(np.int32)
        we = np.concatenate([last, np.full((Sp - S,), last[-1])]).astype(np.int32)

    nq = Sp // tq
    kvs = np.zeros((nq,), np.int32)
    kvc = np.zeros((nq,), np.int32)
    for i in range(nq):
        lo = int(ws[i * tq:(i + 1) * tq].min()) // tq
        hi = -(-int(we[i * tq:(i + 1) * tq].max()) // tq)
        hi = max(hi, lo + 1)
        kvs[i] = lo
        kvc[i] = hi - lo
    return {"ws": jnp.asarray(ws).reshape(Sp, 1),
            "we": jnp.asarray(we).reshape(Sp, 1),
            "kvs": jnp.asarray(kvs),
            "kvc": jnp.asarray(kvc),
            "nkv_max": int(kvc.max()),
            "tq": tq}


# ----------------------------------------------------------------------------
# conv1d (k=3, pad=1) as bf16 im2col glue + tiled matmul (+gelu, +fused pos add)
# ----------------------------------------------------------------------------
# TODO(synk): fold the K=3 taps into the matmul K loop (shifted-row blocks)
# instead of materializing the im2col buffer.
def conv1d_gelu(x_tc, w, b, stride, residual=None):
    """x_tc: (T, Cin) time-major; w: torch layout (Cout, Cin, K=3)."""
    T, Cin = x_tc.shape
    Cout, _, K = w.shape
    xb = x_tc.astype(jnp.bfloat16)
    xp = jnp.pad(xb, ((1, 1), (0, 0)))
    T_out = (T + 2 - K) // stride + 1
    cols = jnp.concatenate(
        [xp[k:k + stride * (T_out - 1) + 1:stride, :] for k in range(K)], axis=1)
    w2 = jnp.transpose(w, (2, 1, 0)).reshape(K * Cin, Cout)
    return linear(cols, w2, b, act="gelu", residual=residual)


# ----------------------------------------------------------------------------
# encoder layer + full forward (mirrors Qwen2_5OmniAudio.forward)
# ----------------------------------------------------------------------------
def encoder_layer(h, p, num_heads, attn_meta):
    D = h.shape[1]
    Dh = D // num_heads
    scale = float(Dh) ** -0.5
    # softmax scale folded into the q-projection weights (zero runtime cost)
    w_qkv = jnp.concatenate([p["wq"] * scale, p["wk"], p["wv"]], axis=1)
    b_qkv = jnp.concatenate([p["bq"] * scale, p["bk"], p["bv"]])
    # LN1 fused into the fused QKV matmul; residual fused into the out-proj.
    qkv = ln_linear(h, p["ln1_g"], p["ln1_b"], w_qkv, b_qkv, keep_padded=True)
    attn = flash_attention(qkv, D, num_heads, attn_meta)
    h = linear(attn, p["wo"], p["bo"], residual=h)
    # LN2 fused into fc1 (+gelu); residual fused into fc2.
    m = ln_linear(h, p["ln2_g"], p["ln2_b"], p["w_fc1"], p["b_fc1"], act="gelu")
    h = linear(m, p["w_fc2"], p["b_fc2"], residual=h)
    return h


def qwen2_5_omni_audio_forward(input_features, params, attention_mask=None):
    # input_features: (1, n_mels, T) -- PyTorch NCL layout
    x = input_features[0].T.astype(jnp.float32)             # (T, n_mels)
    T = x.shape[0]
    h = conv1d_gelu(x, params["conv1_w"], params["conv1_b"], stride=1)
    S = (T - 1) // 2 + 1                                     # conv2 out length
    pos = params["pos_emb"][:S]
    # pos-emb add fused into conv2's matmul epilogue (as a residual)
    h = conv1d_gelu(h, params["conv2_w"], params["conv2_b"], stride=2,
                    residual=pos)                            # (S, D) bf16

    # pad the sequence once to a tile multiple; keep it padded across layers
    D = h.shape[1]
    ts = min(SEQ_TILE, _round_up(S, 8))
    Sp = _round_up(S, ts)
    h = _pad2(h, Sp, D)
    tq = min(SEQ_TILE, Sp)
    attn_meta = _window_meta(attention_mask, S, Sp, tq)

    for lp in params["layers"]:
        h = encoder_layer(h, lp, params["num_heads"], attn_meta)

    # avg-pool (k=2, s=2) fused into the ln_post + proj kernel: row pairs are
    # packed side by side on the lane axis, averaged inside the LN prologue.
    Kp = _round_up(D, 128)
    S2 = S // 2
    if D == Kp:
        packed = h[:2 * S2].reshape(S2, 2 * D)
    else:
        a = h[0:2 * S2:2]
        b = h[1:2 * S2:2]
        packed = jnp.concatenate([_pad2(a, S2, Kp), _pad2(b, S2, Kp)], axis=1)
    out = ln_linear(packed, params["ln_post_g"], params["ln_post_b"],
                    params["proj_w"], params["proj_b"],
                    out_dtype=jnp.float32, pool2=True)
    return out[:S2][None]                                    # (1, S//2, llm_hidden)


# ----------------------------------------------------------------------------
# deterministic parameter init + driver
# ----------------------------------------------------------------------------
def make_params(key, n_mels, d_model, num_heads, ffn, llm_hidden, n_layers,
                max_pos):
    def nrm(k, shape, scale=0.02):
        return (scale * jax.random.normal(k, shape)).astype(jnp.float32)

    keys = iter(jax.random.split(key, 200))
    params = {
        "num_heads": num_heads,
        "conv1_w": nrm(next(keys), (d_model, n_mels, 3)),
        "conv1_b": nrm(next(keys), (d_model,)),
        "conv2_w": nrm(next(keys), (d_model, d_model, 3)),
        "conv2_b": nrm(next(keys), (d_model,)),
        "pos_emb": nrm(next(keys), (max_pos, d_model)),
        "ln_post_g": jnp.ones((d_model,), jnp.float32),
        "ln_post_b": jnp.zeros((d_model,), jnp.float32),
        "proj_w": nrm(next(keys), (d_model, llm_hidden)),
        "proj_b": nrm(next(keys), (llm_hidden,)),
        "layers": [],
    }
    for _ in range(n_layers):
        lp = {
            "ln1_g": jnp.ones((d_model,), jnp.float32),
            "ln1_b": jnp.zeros((d_model,), jnp.float32),
            "wq": nrm(next(keys), (d_model, d_model)),
            "bq": nrm(next(keys), (d_model,)),
            "wk": nrm(next(keys), (d_model, d_model)),
            "bk": jnp.zeros((d_model,), jnp.float32),   # Whisper k_proj: no bias
            "wv": nrm(next(keys), (d_model, d_model)),
            "bv": nrm(next(keys), (d_model,)),
            "wo": nrm(next(keys), (d_model, d_model)),
            "bo": nrm(next(keys), (d_model,)),
            "ln2_g": jnp.ones((d_model,), jnp.float32),
            "ln2_b": jnp.zeros((d_model,), jnp.float32),
            "w_fc1": nrm(next(keys), (d_model, ffn)),
            "b_fc1": nrm(next(keys), (ffn,)),
            "w_fc2": nrm(next(keys), (ffn, d_model)),
            "b_fc2": nrm(next(keys), (d_model,)),
        }
        params["layers"].append(lp)
    return params


if __name__ == "__main__":
    # small synthetic config (real model: n_mels=128, d_model=1280, heads=20,
    # ffn=5120, T=3000, 32 layers); exercises seq padding, windowed block-sparse
    # attention, head grouping, fused pool+ln_post+proj.
    n_mels, T = 32, 60
    d_model, num_heads, ffn = 128, 2, 256
    llm_hidden, n_layers = 80, 2
    n_window = 8

    key = jax.random.PRNGKey(0)
    kp, kx = jax.random.split(key)
    params = make_params(kp, n_mels, d_model, num_heads, ffn, llm_hidden,
                         n_layers, max_pos=64)
    input_features = jax.random.normal(kx, (1, n_mels, T), jnp.float32)

    # windowed block-diagonal attention mask, like Qwen2_5OmniAudio.audio_process
    S = T // 2
    cu = list(range(0, S, n_window)) + [S]
    mask = jnp.full((1, S, S), jnp.finfo(jnp.float32).min, jnp.float32)
    for i in range(1, len(cu)):
        mask = mask.at[:, cu[i - 1]:cu[i], cu[i - 1]:cu[i]].set(0.0)

    out = qwen2_5_omni_audio_forward(input_features, params,
                                     attention_mask=mask)
    out = jax.block_until_ready(out)

    expected_seq = (T // 2) // 2      # conv2 stride 2, then avg-pool 2
    assert out.shape == (1, expected_seq, llm_hidden), out.shape
    assert bool(jnp.all(jnp.isfinite(out)))

    # TODO(synk): STFT / mel-filterbank preprocessing, tokenizer and ONNX-export
    # paths of the module are host-side glue and are intentionally not kernels.
    print("KERNEL_OK")
</pallas_src>

<mosaic_0001>
module attributes {stable_mosaic.version = 11 : i64} {
  func.func @_matmul_kernel(%arg0: i32, %arg1: i32, %arg2: i32, %arg3: memref<64x128xbf16, #tpu.memory_space<vmem>>, %arg4: memref<128x128xbf16, #tpu.memory_space<vmem>>, %arg5: memref<1x128xf32, #tpu.memory_space<vmem>>, %arg6: memref<64x128xbf16, #tpu.memory_space<vmem>>, %arg7: memref<64x128xf32, #tpu.memory_space<vmem>>) attributes {dimension_semantics = [#tpu.dimension_semantics<parallel>, #tpu.dimension_semantics<parallel>, #tpu.dimension_semantics<arbitrary>], iteration_bounds = array<i64: 1, 1, 1>, scalar_prefetch = 0 : i64, scratch_operands = 1 : i64, tpu.core_type = #tpu.core_type<tc>, window_params = [{transform_indices = @transform_0, window_bounds = array<i64: 64, 128>}, {transform_indices = @transform_1, window_bounds = array<i64: 128, 128>}, {transform_indices = @transform_2, window_bounds = array<i64: 1, 128>}, {transform_indices = @transform_3, window_bounds = array<i64: 64, 128>}]} {
    %c0_i32 = arith.constant 0 : i32
    %0 = arith.cmpi eq, %arg2, %c0_i32 : i32
    %1 = arith.extui %0 : i1 to i32
    %c0_i32_0 = arith.constant 0 : i32
    %2 = arith.cmpi ne, %1, %c0_i32_0 : i32
    scf.if %2 {
      %cst_10 = arith.constant 0.000000e+00 : f32
      %12 = vector.broadcast %cst_10 : f32 to vector<64x128xf32>
      %c0_11 = arith.constant 0 : index
      %c0_12 = arith.constant 0 : index
      %13 = vector.load %arg7[%c0_11, %c0_12] : memref<64x128xf32, #tpu.memory_space<vmem>>, vector<64x128xf32>
      tpu.vector_store %arg7[%c0_11, %c0_12], %12 {strides = array<i32>} : memref<64x128xf32, #tpu.memory_space<vmem>>, vector<64x128xf32>,
    } else {
    }
    %c0 = arith.constant 0 : index
    %c0_1 = arith.constant 0 : index
    %3 = vector.load %arg7[%c0, %c0_1] : memref<64x128xf32, #tpu.memory_space<vmem>>, vector<64x128xf32>
    %c0_2 = arith.constant 0 : index
    %c0_3 = arith.constant 0 : index
    %4 = vector.load %arg3[%c0_2, %c0_3] : memref<64x128xbf16, #tpu.memory_space<vmem>>, vector<64x128xbf16>
    %c0_4 = arith.constant 0 : index
    %c0_5 = arith.constant 0 : index
    %5 = vector.load %arg4[%c0_4, %c0_5] : memref<128x128xbf16, #tpu.memory_space<vmem>>, vector<128x128xbf16>
    %cst = arith.constant dense<0.000000e+00> : vector<64x128xf32>
    %6 = tpu.matmul %4, %5, %cst {dimension_numbers = #tpu.dot_dimension_numbers<[1], [0], [0], [1], [0, 0, 1, 1], [], []>} : vector<64x128xbf16>, vector<128x128xbf16>, vector<64x128xf32> -> vector<64x128xf32>
    %7 = arith.addf %3, %6 : vector<64x128xf32>
    %c0_6 = arith.constant 0 : index
    %c0_7 = arith.constant 0 : index
    %8 = vector.load %arg7[%c0_6, %c0_7] : memref<64x128xf32, #tpu.memory_space<vmem>>, vector<64x128xf32>
    tpu.vector_store %arg7[%c0_6, %c0_7], %7 {strides = array<i32>} : memref<64x128xf32, #tpu.memory_space<vmem>>, vector<64x128xf32>,
    %c0_i32_8 = arith.constant 0 : i32
    %9 = arith.cmpi eq, %arg2, %c0_i32_8 : i32
    %10 = arith.extui %9 : i1 to i32
    %c0_i32_9 = arith.constant 0 : i32
    %11 = arith.cmpi ne, %10, %c0_i32_9 : i32
    scf.if %11 {
      %c0_10 = arith.constant 0 : index
      %c0_11 = arith.constant 0 : index
      %12 = vector.load %arg7[%c0_10, %c0_11] : memref<64x128xf32, #tpu.memory_space<vmem>>, vector<64x128xf32>
      %c0_12 = arith.constant 0 : index
      %c0_13 = arith.constant 0 : index
      %13 = vector.load %arg5[%c0_12, %c0_13] : memref<1x128xf32, #tpu.memory_space<vmem>>, vector<1x128xf32>
      %14 = vector.broadcast %13 : vector<1x128xf32> to vector<64x128xf32>
      %15 = arith.addf %12, %14 : vector<64x128xf32>
      %cst_14 = arith.constant 5.000000e-01 : f32
      %16 = vector.broadcast %cst_14 : f32 to vector<64x128xf32>
      %17 = arith.mulf %16, %15 : vector<64x128xf32>
      %cst_15 = arith.constant 4.471500e-02 : f32
      %18 = vector.broadcast %cst_15 : f32 to vector<64x128xf32>
      %19 = arith.mulf %18, %15 : vector<64x128xf32>
      %20 = arith.mulf %19, %15 : vector<64x128xf32>
      %21 = arith.mulf %20, %15 : vector<64x128xf32>
      %22 = arith.addf %15, %21 : vector<64x128xf32>
      %cst_16 = arith.constant 0.797884583 : f32
      %23 = vector.broadcast %cst_16 : f32 to vector<64x128xf32>
      %24 = arith.mulf %23, %22 : vector<64x128xf32>
      %25 = math.tanh %24 : vector<64x128xf32>
      %cst_17 = arith.constant 1.000000e+00 : f32
      %26 = vector.broadcast %cst_17 : f32 to vector<64x128xf32>
      %27 = arith.addf %26, %25 : vector<64x128xf32>
      %28 = arith.mulf %17, %27 : vector<64x128xf32>
      %29 = arith.truncf %28 : vector<64x128xf32> to vector<64x128xbf16>
      %c0_18 = arith.constant 0 : index
      %c0_19 = arith.constant 0 : index
      %30 = vector.load %arg6[%c0_18, %c0_19] : memref<64x128xbf16, #tpu.memory_space<vmem>>, vector<64x128xbf16>
      tpu.vector_store %arg6[%c0_18, %c0_19], %29 {strides = array<i32>} : memref<64x128xbf16, #tpu.memory_space<vmem>>, vector<64x128xbf16>,
    } else {
    }
    return
  }
  func.func @transform_0(%arg0: i32, %arg1: i32, %arg2: i32) -> (i32, i32) {
    %c0_i32 = arith.constant 0 : i32
    return %arg0, %arg2 : i32, i32
  }
  func.func @transform_1(%arg0: i32, %arg1: i32, %arg2: i32) -> (i32, i32) {
    %c0_i32 = arith.constant 0 : i32
    return %arg2, %arg1 : i32, i32
  }
  func.func @transform_2(%arg0: i32, %arg1: i32, %arg2: i32) -> (i32, i32) {
    %c0_i32 = arith.constant 0 : i32
    %c0_i32_0 = arith.constant 0 : i32
    return %c0_i32, %arg1 : i32, i32
  }
  func.func @transform_3(%arg0: i32, %arg1: i32, %arg2: i32) -> (i32, i32) {
    %c0_i32 = arith.constant 0 : i32
    return %arg0, %arg1 : i32, i32
  }
}

</mosaic_0001>

<llo_original>
// kernel: tpu_custom_call.1
$region0: #{tpu_custom_call.1}
  #allocation0 [shape = 'u32[]', space=smem, size = 0x4, offset = 0x4, fixed_abs, tag = 'smem constant byte address 0x4 - core index']
  #allocation1 [shape = 'u32[144,128]{1,0:T(1,128)}', space=vmem, size = 0x12000, scoped, tag = 'internal scratch']
  #allocation2 [shape = 'f32[64,128]{1,0:T(8,128)}', space=vmem, size = 0x8000, scoped, tag = 'scratch operand']
  %s0 = inlined_call_operand.hbm [shape: bf16[64,128], index: 0, kind: input, shape index: {}]
  %s1 = inlined_call_operand.hbm [shape: bf16[128,128], index: 1, kind: input, shape index: {}]
  %s2 = inlined_call_operand.vmem [shape: f32[1,128], index: 2, kind: input, shape index: {}]
  %s3 = inlined_call_operand.hbm [shape: bf16[64,128], index: 3, kind: output, shape index: {}]
  %s4 = sld [smem:[#allocation0]]
  $region38: #{tpu_custom_call.1} parent=0
    _
  %s6 = ssub.s32 1, %s4
  %s7 = scalar_select 0, %s6, %s4
  $region1: #{tpu_custom_call.1} parent=0
    #allocation3 [shape = 'u8[16384]{0}', space=vmem, size = 0x4000, scoped, tag = 'input window, operand 0, single buffered']
    #allocation4 [shape = 's32[1]{0}', space=sflag, size = 0x4, scoped, tag = 'scoped memory for tpu_custom_call.1']
    #allocation5 [shape = 's32[1]{0}', space=sflag, size = 0x4, scoped, tag = 'scoped memory for tpu_custom_call.1']
    #allocation6 [shape = 'u8[32768]{0}', space=vmem, size = 0x8000, scoped, tag = 'input window, operand 1, single buffered']
    #allocation7 [shape = 's32[1]{0}', space=sflag, size = 0x4, scoped, tag = 'scoped memory for tpu_custom_call.1']
    #allocation8 [shape = 'u8[16384]{0}', space=vmem, size = 0x4000, scoped, tag = 'output window, operand 0, single buffered']
    %8 = vsyncpa [#allocation4], 0
    %9 = vsyncpa [#allocation7], 0
    %10 = vsyncpa [#allocation5], 0
    // Predicated region
    $region2: #{tpu_custom_call.1} parent=1 // pred_check
      _
    $region3: #{tpu_custom_call.1} parent=1 // pred_check_branch
      %12 = sbr.rel (0) target = $region5
    $region4: #{tpu_custom_call.1} parent=1 // pred_region
      %s14 = ssub.s32 512, 512
      %15 = vsyncadd [#allocation4], %s14
      %s16 = sshll.u32 [#allocation3], 4
      %s17 = int_to_ptr.vmem [resolvable:$true] %s16
      %22 = dma.hbm_to_vmem [thread:$0]  %s0, 512, %s17, [#allocation4], 64, 64, 4
    $region5: #{tpu_custom_call.1} parent=1 // pred_fallthru
      _
    // Predicated region
    $region6: #{tpu_custom_call.1} parent=1 // pred_check
      _
    $region7: #{tpu_custom_call.1} parent=1 // pred_check_branch
      %24 = sbr.rel (0) target = $region9
    $region8: #{tpu_custom_call.1} parent=1 // pred_region
      %s26 = ssub.s32 1024, 1024
      %27 = vsyncadd [#allocation7], %s26
      %s28 = sshll.u32 [#allocation6], 4
      %s29 = int_to_ptr.vmem [resolvable:$true] %s28
      %34 = dma.hbm_to_vmem [thread:$0]  %s1, 1024, %s29, [#allocation7], 64, 64, 4
    $region9: #{tpu_custom_call.1} parent=1 // pred_fallthru
      _
    // Predicated region
    $region10: #{tpu_custom_call.1} parent=1 // pred_check
      _
    $region11: #{tpu_custom_call.1} parent=1 // pred_check_branch
      %36 = sbr.rel (0) target = $region13
    $region12: #{tpu_custom_call.1} parent=1 // pred_region
      _
    $region13: #{tpu_custom_call.1} parent=1 // pred_fallthru
      _
    // Predicated region
    $region14: #{tpu_custom_call.1} parent=1 // pred_check
      _
    $region15: #{tpu_custom_call.1} parent=1 // pred_check_branch
      %38 = sbr.rel (0) target = $region17
    $region16: #{tpu_custom_call.1} parent=1 // pred_region
      %39 = dma.done [#allocation4], 512
    $region17: #{tpu_custom_call.1} parent=1 // pred_fallthru
      _
    // Predicated region
    $region18: #{tpu_custom_call.1} parent=1 // pred_check
      _
    $region19: #{tpu_custom_call.1} parent=1 // pred_check_branch
      %41 = sbr.rel (0) target = $region21
    $region20: #{tpu_custom_call.1} parent=1 // pred_region
      %42 = dma.done [#allocation7], 1024
    $region21: #{tpu_custom_call.1} parent=1 // pred_fallthru
      _
    %p44 = scmp.eq.s32.totalorder 0, 0
    // Predicated region
    $region22: #{tpu_custom_call.1} parent=1 // pred_check
      %p45 = pneg %p44
    $region23: #{tpu_custom_call.1} parent=1 // pred_check_branch
      %47 = sbr.rel (%p45) target = $region25
    $region24: #{tpu_custom_call.1} parent=1 // pred_region
      %48 = vst [vmem:[#allocation2] sm:$0xff] 0.0
      %49 = vst [vmem:[#allocation2 + $0x8] sm:$0xff] 0.0
      %50 = vst [vmem:[#allocation2 + $0x10] sm:$0xff] 0.0
      %51 = vst [vmem:[#allocation2 + $0x18] sm:$0xff] 0.0
      %52 = vst [vmem:[#allocation2 + $0x20] sm:$0xff] 0.0
      %53 = vst [vmem:[#allocation2 + $0x28] sm:$0xff] 0.0
      %54 = vst [vmem:[#allocation2 + $0x30] sm:$0xff] 0.0
      %55 = vst [vmem:[#allocation2 + $0x38] sm:$0xff] 0.0
    $region25: #{tpu_custom_call.1} parent=1 // pred_fallthru
      _
    %v56 = vld [vmem:[#allocation2] sm:$0xff]
    %v57 = vld [vmem:[#allocation2 + $0x8] sm:$0xff]
    %v58 = vld [vmem:[#allocation2 + $0x10] sm:$0xff]
    %v59 = vld [vmem:[#allocation2 + $0x18] sm:$0xff]
    %v60 = vld [vmem:[#allocation2 + $0x20] sm:$0xff]
    %v61 = vld [vmem:[#allocation2 + $0x28] sm:$0xff]
    %v62 = vld [vmem:[#allocation2 + $0x30] sm:$0xff]
    %v63 = vld [vmem:[#allocation2 + $0x38] sm:$0xff]
    %v64 = vld [vmem:[#allocation3] sm:$0xf]
    %v65 = vld [vmem:[#allocation3 + $0x4] sm:$0xf]
    %v66 = vld [vmem:[#allocation3 + $0x8] sm:$0xf]
    %v67 = vld [vmem:[#allocation3 + $0xc] sm:$0xf]
    %v68 = vld [vmem:[#allocation3 + $0x10] sm:$0xf]
    %v69 = vld [vmem:[#allocation3 + $0x14] sm:$0xf]
    %v70 = vld [vmem:[#allocation3 + $0x18] sm:$0xf]
    %v71 = vld [vmem:[#allocation3 + $0x1c] sm:$0xf]
    %v72 = vld [vmem:[#allocation6] sm:$0xf]
    %v73 = vld [vmem:[#allocation6 + $0x4] sm:$0xf]
    %v74 = vld [vmem:[#allocation6 + $0x8] sm:$0xf]
    %v75 = vld [vmem:[#allocation6 + $0xc] sm:$0xf]
    %v76 = vld [vmem:[#allocation6 + $0x10] sm:$0xf]
    %v77 = vld [vmem:[#allocation6 + $0x14] sm:$0xf]
    %v78 = vld [vmem:[#allocation6 + $0x18] sm:$0xf]
    %v79 = vld [vmem:[#allocation6 + $0x1c] sm:$0xf]
    %v80 = vld [vmem:[#allocation6 + $0x20] sm:$0xf]
    %v81 = vld [vmem:[#allocation6 + $0x24] sm:$0xf]
    %v82 = vld [vmem:[#allocation6 + $0x28] sm:$0xf]
    %v83 = vld [vmem:[#allocation6 + $0x2c] sm:$0xf]
    %v84 = vld [vmem:[#allocation6 + $0x30] sm:$0xf]
    %v85 = vld [vmem:[#allocation6 + $0x34] sm:$0xf]
    %v86 = vld [vmem:[#allocation6 + $0x38] sm:$0xf]
    %v87 = vld [vmem:[#allocation6 + $0x3c] sm:$0xf]
    %v96 = vunpack.c.l.b16 %v64
    %v97 = vunpack.c.l.b16 %v65
    %v98 = vunpack.c.l.b16 %v66
    %v99 = vunpack.c.l.b16 %v67
    %v100 = vunpack.c.l.b16 %v68
    %v101 = vunpack.c.l.b16 %v69
    %v102 = vunpack.c.l.b16 %v70
    %v103 = vunpack.c.l.b16 %v71
    %v104 = vpack.c.b16 %v97, %v96
    %v105 = vpack.c.b16 %v99, %v98
    %v106 = vpack.c.b16 %v101, %v100
    %v107 = vpack.c.b16 %v103, %v102
    %v128 = vunpack.c.l.b16 %v72
    %v129 = vunpack.c.l.b16 %v73
    %v130 = vunpack.c.l.b16 %v74
    %v131 = vunpack.c.l.b16 %v75
    %v132 = vunpack.c.l.b16 %v76
    %v133 = vunpack.c.l.b16 %v77
    %v134 = vunpack.c.l.b16 %v78
    %v135 = vunpack.c.l.b16 %v79
    %v136 = vunpack.c.l.b16 %v80
    %v137 = vunpack.c.l.b16 %v81
    %v138 = vunpack.c.l.b16 %v82
    %v139 = vunpack.c.l.b16 %v83
    %v140 = vunpack.c.l.b16 %v84
    %v141 = vunpack.c.l.b16 %v85
    %v142 = vunpack.c.l.b16 %v86
    %v143 = vunpack.c.l.b16 %v87
    %v144 = vpack.c.b16 %v129, %v128
    %v145 = vpack.c.b16 %v131, %v130
    %v146 = vpack.c.b16 %v133, %v132
    %v147 = vpack.c.b16 %v135, %v134
    %v148 = vpack.c.b16 %v137, %v136
    %v149 = vpack.c.b16 %v139, %v138
    %v150 = vpack.c.b16 %v141, %v140
    %v151 = vpack.c.b16 %v143, %v142
    %160 = vmatprep.subr.bf16.mxu0 0
    %161 = vmatpush1.bf16.msra.mxu0 %v144
    %162 = vmatprep.subr.bf16.mxu0 0
    %163 = vmatpush1.bf16.msra.mxu0 %v145
    %164 = vmatprep.subr.bf16.mxu0 0
    %165 = vmatpush1.bf16.msra.mxu0 %v146
    %166 = vmatprep.subr.bf16.mxu0 0
    %167 = vmatpush1.bf16.msra.mxu0 %v147
    %168 = vmatprep.subr.bf16.mxu0 0
    %169 = vmatpush1.bf16.msra.mxu0 %v148
    %170 = vmatprep.subr.bf16.mxu0 0
    %171 = vmatpush1.bf16.msra.mxu0 %v149
    %172 = vmatprep.subr.bf16.mxu0 0
    %173 = vmatpush1.bf16.msra.mxu0 %v150
    %174 = vmatprep.subr.bf16.mxu0 0
    %175 = vmatpush1.bf16.msra.mxu0 %v151
    %176 = vmatprep.subr.bf16.mxu0 0
    %177 = vmatpush1.bf16.msra.mxu0 0
    %178 = vmatprep.subr.bf16.mxu0 0
    %179 = vmatpush1.bf16.msra.mxu0 0
    %180 = vmatprep.subr.bf16.mxu0 0
    %181 = vmatpush1.bf16.msra.mxu0 0
    %182 = vmatprep.subr.bf16.mxu0 0
    %183 = vmatpush1.bf16.msra.mxu0 0
    %184 = vmatprep.subr.bf16.mxu0 0
    %185 = vmatpush1.bf16.msra.mxu0 0
    %186 = vmatprep.subr.bf16.mxu0 0
    %187 = vmatpush1.bf16.msra.mxu0 0
    %188 = vmatprep.subr.bf16.mxu0 0
    %189 = vmatpush1.bf16.msra.mxu0 0
    %190 = vmatprep.subr.bf16.mxu0 0
    %191 = vmatpush1.bf16.msra.mxu0 0
    %192 = vmatprep.mubr.bf16.mxu0 0
    %193 = vmatmul.mubr.bf16.gmra.mrb[0].mxu0 %v104
    %v194 = vpop.f32.mrb[0].mxu0
    %v195 = vadd.f32 0.0, %v194
    %v196 = vpop.f32.mrb[0].mxu0
    %v197 = vpop.f32.mrb[0].mxu0
    %v198 = vadd.f32 0.0, %v197
    %v199 = vpop.f32.mrb[0].mxu0
    %200 = vmatprep.mubr.bf16.mxu0 0
    %201 = vmatmul.mubr.bf16.gmra.mrb[0].mxu0 %v105
    %v202 = vpop.f32.mrb[0].mxu0
    %v203 = vadd.f32 0.0, %v202
    %v204 = vpop.f32.mrb[0].mxu0
    %v205 = vpop.f32.mrb[0].mxu0
    %v206 = vadd.f32 0.0, %v205
    %v207 = vpop.f32.mrb[0].mxu0
    %208 = vmatprep.mubr.bf16.mxu0 0
    %209 = vmatmul.mubr.bf16.gmra.mrb[0].mxu0 %v106
    %v210 = vpop.f32.mrb[0].mxu0
    %v211 = vadd.f32 0.0, %v210
    %v212 = vpop.f32.mrb[0].mxu0
    %v213 = vpop.f32.mrb[0].mxu0
    %v214 = vadd.f32 0.0, %v213
    %v215 = vpop.f32.mrb[0].mxu0
    %216 = vmatprep.mubr.bf16.mxu0 0
    %217 = vmatmul.mubr.bf16.gmra.mrb[0].mxu0 %v107
    %v218 = vpop.f32.mrb[0].mxu0
    %v219 = vadd.f32 0.0, %v218
    %v220 = vpop.f32.mrb[0].mxu0
    %v221 = vpop.f32.mrb[0].mxu0
    %v222 = vadd.f32 0.0, %v221
    %v223 = vpop.f32.mrb[0].mxu0
    %224 = vdwg.mxu0
    %v225 = vadd.f32 %v56, %v195
    %v226 = vadd.f32 %v57, %v198
    %v227 = vadd.f32 %v58, %v203
    %v228 = vadd.f32 %v59, %v206
    %v229 = vadd.f32 %v60, %v211
    %v230 = vadd.f32 %v61, %v214
    %v231 = vadd.f32 %v62, %v219
    %v232 = vadd.f32 %v63, %v222
    %233 = vst [vmem:[#allocation2] sm:$0xff] %v225
    %234 = vst [vmem:[#allocation2 + $0x8] sm:$0xff] %v226
    %235 = vst [vmem:[#allocation2 + $0x10] sm:$0xff] %v227
    %236 = vst [vmem:[#allocation2 + $0x18] sm:$0xff] %v228
    %237 = vst [vmem:[#allocation2 + $0x20] sm:$0xff] %v229
    %238 = vst [vmem:[#allocation2 + $0x28] sm:$0xff] %v230
    %239 = vst [vmem:[#allocation2 + $0x30] sm:$0xff] %v231
    %240 = vst [vmem:[#allocation2 + $0x38] sm:$0xff] %v232
    // Predicated region
    $region26: #{tpu_custom_call.1} parent=1 // pred_check
      %p241 = pneg %p44
    $region27: #{tpu_custom_call.1} parent=1 // pred_check_branch
      %243 = sbr.rel (%p241) target = $region29
    $region28: #{tpu_custom_call.1} parent=1 // pred_region
      %v244 = vld [vmem:[#allocation2] sm:$0xff]
      %v245 = vld [vmem:[#allocation2 + $0x8] sm:$0xff]
      %v246 = vld [vmem:[#allocation2 + $0x10] sm:$0xff]
      %v247 = vld [vmem:[#allocation2 + $0x18] sm:$0xff]
      %v248 = vld [vmem:[#allocation2 + $0x20] sm:$0xff]
      %v249 = vld [vmem:[#allocation2 + $0x28] sm:$0xff]
      %v250 = vld [vmem:[#allocation2 + $0x30] sm:$0xff]
      %v251 = vld [vmem:[#allocation2 + $0x38] sm:$0xff]
      %v252 = vld [vmem:[%s2] sm:$0x1]
      %v254 = vlaneseq
      %v255 = vshrl.u32 %v254, 7
      %v256 = vsub.s32 0, %v255
      %v257 = vrot.slane %v252, %v256
      %v259 = vadd.f32 %v244, %v257
      %v260 = vadd.f32 %v245, %v257
      %v261 = vadd.f32 %v246, %v257
      %v262 = vadd.f32 %v247, %v257
      %v263 = vadd.f32 %v248, %v257
      %v264 = vadd.f32 %v249, %v257
      %v265 = vadd.f32 %v250, %v257
      %v266 = vadd.f32 %v251, %v257
      %v267 = vmul.f32 %v259, 0.5
      %v268 = vmul.f32 %v260, 0.5
      %v269 = vmul.f32 %v261, 0.5
      %v270 = vmul.f32 %v262, 0.5
      %v271 = vmul.f32 %v263, 0.5
      %v272 = vmul.f32 %v264, 0.5
      %v273 = vmul.f32 %v265, 0.5
      %v274 = vmul.f32 %v266, 0.5
      %v275 = vmul.f32 %v259, 0.044715
      %v276 = vmul.f32 %v260, 0.044715
      %v277 = vmul.f32 %v261, 0.044715
      %v278 = vmul.f32 %v262, 0.044715
      %v279 = vmul.f32 %v263, 0.044715
      %v280 = vmul.f32 %v264, 0.044715
      %v281 = vmul.f32 %v265, 0.044715
      %v282 = vmul.f32 %v266, 0.044715
      %v283 = vmul.f32 %v275, %v259
      %v284 = vmul.f32 %v276, %v260
      %v285 = vmul.f32 %v277, %v261
      %v286 = vmul.f32 %v278, %v262
      %v287 = vmul.f32 %v279, %v263
      %v288 = vmul.f32 %v280, %v264
      %v289 = vmul.f32 %v281, %v265
      %v290 = vmul.f32 %v282, %v266
      %v291 = vmul.f32 %v283, %v259
      %v292 = vmul.f32 %v284, %v260
      %v293 = vmul.f32 %v285, %v261
      %v294 = vmul.f32 %v286, %v262
      %v295 = vmul.f32 %v287, %v263
      %v296 = vmul.f32 %v288, %v264
      %v297 = vmul.f32 %v289, %v265
      %v298 = vmul.f32 %v290, %v266
      %v299 = vadd.f32 %v259, %v291
      %v300 = vadd.f32 %v260, %v292
      %v301 = vadd.f32 %v261, %v293
      %v302 = vadd.f32 %v262, %v294
      %v303 = vadd.f32 %v263, %v295
      %v304 = vadd.f32 %v264, %v296
      %v305 = vadd.f32 %v265, %v297
      %v306 = vadd.f32 %v266, %v298
      %v307 = vmul.f32 %v299, 0.7978846
      %v308 = vmul.f32 %v300, 0.7978846
      %v309 = vmul.f32 %v301, 0.7978846
      %v310 = vmul.f32 %v302, 0.7978846
      %v311 = vmul.f32 %v303, 0.7978846
      %v312 = vmul.f32 %v304, 0.7978846
      %v313 = vmul.f32 %v305, 0.7978846
      %v314 = vmul.f32 %v306, 0.7978846
      %v315 = vtanh.pop %v307
      %v316 = vtanh.pop %v308
      %v317 = vtanh.pop %v309
      %v318 = vtanh.pop %v310
      %v319 = vtanh.pop %v311
      %v320 = vtanh.pop %v312
      %v321 = vtanh.pop %v313
      %v322 = vtanh.pop %v314
      %v323 = vadd.f32 %v315, 1.0
      %v324 = vadd.f32 %v316, 1.0
      %v325 = vadd.f32 %v317, 1.0
      %v326 = vadd.f32 %v318, 1.0
      %v327 = vadd.f32 %v319, 1.0
      %v328 = vadd.f32 %v320, 1.0
      %v329 = vadd.f32 %v321, 1.0
      %v330 = vadd.f32 %v322, 1.0
      %v331 = vmul.f32 %v267, %v323
      %v332 = vmul.f32 %v268, %v324
      %v333 = vmul.f32 %v269, %v325
      %v334 = vmul.f32 %v270, %v326
      %v335 = vmul.f32 %v271, %v327
      %v336 = vmul.f32 %v272, %v328
      %v337 = vmul.f32 %v273, %v329
      %v338 = vmul.f32 %v274, %v330
      %v339 = vpack.c.bf16 %v332, %v331
      %v340 = vpack.c.bf16 %v334, %v333
      %v341 = vpack.c.bf16 %v336, %v335
      %v342 = vpack.c.bf16 %v338, %v337
      %v347 = vunpack.c.l.b16 %v339
      %v348 = vunpack.c.h.b16 %v339
      %v349 = vunpack.c.l.b16 %v340
      %v350 = vunpack.c.h.b16 %v340
      %v351 = vunpack.c.l.b16 %v341
      %v352 = vunpack.c.h.b16 %v341
      %v353 = vunpack.c.l.b16 %v342
      %v354 = vunpack.c.h.b16 %v342
      %v355 = vpack.c.b16 %v347, %v347
      %v356 = vpack.c.b16 %v348, %v348
      %v357 = vpack.c.b16 %v349, %v349
      %v358 = vpack.c.b16 %v350, %v350
      %v359 = vpack.c.b16 %v351, %v351
      %v360 = vpack.c.b16 %v352, %v352
      %v361 = vpack.c.b16 %v353, %v353
      %v362 = vpack.c.b16 %v354, %v354
      %371 = vst [vmem:[#allocation8] sm:$0xf] %v355
      %372 = vst [vmem:[#allocation8 + $0x4] sm:$0xf] %v356
      %373 = vst [vmem:[#allocation8 + $0x8] sm:$0xf] %v357
      %374 = vst [vmem:[#allocation8 + $0xc] sm:$0xf] %v358
      %375 = vst [vmem:[#allocation8 + $0x10] sm:$0xf] %v359
      %376 = vst [vmem:[#allocation8 + $0x14] sm:$0xf] %v360
      %377 = vst [vmem:[#allocation8 + $0x18] sm:$0xf] %v361
      %378 = vst [vmem:[#allocation8 + $0x1c] sm:$0xf] %v362
    $region29: #{tpu_custom_call.1} parent=1 // pred_fallthru
      _
    // Predicated region
    $region30: #{tpu_custom_call.1} parent=1 // pred_check
      _
    $region31: #{tpu_custom_call.1} parent=1 // pred_check_branch
      %380 = sbr.rel (0) target = $region33
    $region32: #{tpu_custom_call.1} parent=1 // pred_region
      %s382 = ssub.s32 512, 512
      %383 = vsyncadd [#allocation5], %s382
      %s384 = sshll.u32 [#allocation8], 4
      %s385 = int_to_ptr.vmem [resolvable:$true] %s384
      %390 = dma.vmem_to_hbm [thread:$0]  %s385, 512, %s3, [#allocation5], 64, 64, 4
    $region33: #{tpu_custom_call.1} parent=1 // pred_fallthru
      _
    // Predicated region
    $region34: #{tpu_custom_call.1} parent=1 // pred_check
      _
    $region35: #{tpu_custom_call.1} parent=1 // pred_check_branch
      %392 = sbr.rel (0) target = $region37
    $region36: #{tpu_custom_call.1} parent=1 // pred_region
      %393 = dma.done [#allocation5], 512
    $region37: #{tpu_custom_call.1} parent=1 // pred_fallthru
      _
    %394 = vsyncpa [#allocation4], 1
    %395 = vsyncpa [#allocation7], 1
    %396 = vsyncpa [#allocation5], 1

</llo_original>
